<compile_context>
chip_gen: v5e
topology: v5e:2x2
jax: 0.10.0
libtpu: 0.0.40
codegen_flags: <defaults>
</compile_context>

<pallas_src>
import functools

import jax
import jax.numpy as jnp
from jax import lax
from jax.experimental import pallas as pl
from jax.experimental.pallas import tpu as pltpu

_LANES = 128
_TILE_ROWS = 2048        # rows of 128 lanes per grid step -> 3 MiB per f32 input block
_MAX_CORE_SPLITS = 2     # leading "parallel" axis (v7x megacore); harmless on 1-TC chips


def _intensity_loss_kernel(x_ref, t_ref, out_ref, *, rows_total, steps_per_split, need_mask):
    """x_ref/t_ref: (3, R, 128) tile of batch-0 channels 0..2 (source dtype).
    out_ref: (1, 8, 128) f32 per-split partial-sum block, resident across the reduction axis."""
    split = pl.program_id(0)
    step = pl.program_id(1)

    @pl.when(step == 0)
    def _init():
        out_ref[...] = jnp.zeros_like(out_ref)

    # Cast after the load so HBM traffic stays in the source dtype.
    x = x_ref[...].astype(jnp.float32)                  # (3, R, 128)
    t = t_ref[...].astype(jnp.float32)

    weighted = x * (t + 1.0)                            # torch.mul(input, target + 1)
    # Channel sum over dense (R, 128) slabs: leading-axis indexing, no sublane slicing.
    in_intensity = (weighted[0] + weighted[1] + weighted[2]) / 3.0   # (R, 128)

    rows_per_step = in_intensity.shape[0]
    if need_mask:
        # Zero rows beyond the real extent BEFORE the squared error so stale / out-of-range
        # tail data cannot inject NaN/Inf (jnp.where is a select; garbage never propagates).
        row_start = (split * steps_per_split + step) * rows_per_step
        row_idx = lax.broadcasted_iota(jnp.int32, in_intensity.shape, 0) + row_start
        in_intensity = jnp.where(row_idx < rows_total, in_intensity, 0.0)

    in_ratio = in_intensity                             # unsqueeze(0) is shape glue
    tar_ratio = in_intensity                            # reference bug preserved
    diff = tar_ratio - in_ratio                         # 0 for finite inputs, NaN otherwise
    sq = diff * diff

    # Lane/sublane-local accumulation only (VPU vreg adds); the single cross-lane reduce and
    # the mean scale happen once, outside the kernel, on the tiny (splits, 8, 128) partials.
    out_ref[...] += sq.reshape(rows_per_step // 8, 8, _LANES).sum(axis=0)[None]


def intensity_loss(inp: jax.Array, tgt: jax.Array) -> jax.Array:
    """Pallas implementation of IntensityLoss.forward. inp/tgt: (N, C, H, W)."""
    N, C, H, W = inp.shape
    assert C >= 3, "reference indexes channels 0..2"
    L = H * W

    if L % _LANES == 0 and L // _LANES >= 8:
        # Metadata-only reshape of the ORIGINAL buffers; the BlockSpec selects rows 0..2
        # (= batch 0, channels 0..2), so the kernel reads exactly the consumed bytes, once.
        rows_total = L // _LANES
        x3 = inp.reshape(N * C, rows_total, _LANES)
        t3 = tgt.reshape(N * C, rows_total, _LANES)
    else:
        # Tiny / ragged spatial extent: slice only the consumed 3 channels and zero-pad up to
        # an (8, 128)-aligned slab (zero padding contributes exactly 0 to the accumulated sum).
        rows_total = pl.cdiv(L, 8 * _LANES) * 8
        pad = rows_total * _LANES - L
        x3 = jnp.pad(inp[0, :3].reshape(3, L), ((0, 0), (0, pad))).reshape(3, rows_total, _LANES)
        t3 = jnp.pad(tgt[0, :3].reshape(3, L), ((0, 0), (0, pad))).reshape(3, rows_total, _LANES)

    # R is always a multiple of 8 (rows_total >= 8 in both paths), so blocks are sublane-dense.
    rows_per_step = min(_TILE_ROWS, (rows_total // 8) * 8)
    num_chunks = pl.cdiv(rows_total, rows_per_step)
    splits = _MAX_CORE_SPLITS if num_chunks >= _MAX_CORE_SPLITS else 1
    steps_per_split = pl.cdiv(num_chunks, splits)
    # Mask needed if any iterated chunk reaches past rows_total (partial tail / odd chunk count).
    need_mask = splits * steps_per_split * rows_per_step != rows_total

    def in_index(s, i):
        # Clamp redundant trailing chunks (odd split) to a valid block; the in-kernel mask
        # (computed from the UNclamped position) zeroes their contribution.
        chunk = jnp.minimum(s * steps_per_split + i, num_chunks - 1)
        return (0, chunk, 0)

    kernel = functools.partial(
        _intensity_loss_kernel,
        rows_total=rows_total,
        steps_per_split=steps_per_split,
        need_mask=need_mask,
    )

    partials = pl.pallas_call(
        kernel,
        out_shape=jax.ShapeDtypeStruct((splits, 8, _LANES), jnp.float32),
        grid_spec=pltpu.PrefetchScalarGridSpec(
            num_scalar_prefetch=0,
            grid=(splits, steps_per_split),
            in_specs=[
                pl.BlockSpec((3, rows_per_step, _LANES), in_index),
                pl.BlockSpec((3, rows_per_step, _LANES), in_index),
            ],
            # Output block depends only on the parallel axis -> one resident accumulator per split.
            out_specs=pl.BlockSpec((1, 8, _LANES), lambda s, i: (s, 0, 0)),
        ),
        compiler_params=pltpu.CompilerParams(
            dimension_semantics=("parallel", "arbitrary"),
            vmem_limit_bytes=48 * 1024 * 1024,
        ),
    )(x3, t3)

    # nn.MSELoss(): mean of (tar_ratio - in_ratio)^2 over the (1, H, W) tensor.
    return jnp.sum(partials) / jnp.float32(L)


def _reference(inp, tgt):
    # Pure-JAX transcription of the PyTorch forward (bug and all).
    inp = inp.astype(jnp.float32)
    tgt = tgt.astype(jnp.float32)
    weighted = inp * (tgt + 1.0)
    in_intensity = (weighted[0, 0] + weighted[0, 1] + weighted[0, 2]) / 3.0
    in_ratio = in_intensity[None]
    tar_ratio = in_intensity[None]
    return jnp.mean((tar_ratio - in_ratio) ** 2)


if __name__ == "__main__":
    key = jax.random.PRNGKey(0)
    k1, k2, k3, k4 = jax.random.split(key, 4)

    # Small shape (exercises the slice+pad fallback layout path).
    N, C, H, W = 2, 4, 16, 16
    inp = jax.random.normal(k1, (N, C, H, W), dtype=jnp.float32)
    tgt = jax.random.normal(k2, (N, C, H, W), dtype=jnp.float32)

    loss = jax.block_until_ready(intensity_loss(inp, tgt))
    ref = jax.block_until_ready(_reference(inp, tgt))
    assert loss.shape == ()
    assert abs(float(loss) - float(ref)) < 1e-6, (float(loss), float(ref))

    # NaN propagation matches the reference (reason the arithmetic is not folded to 0.0).
    tgt_nan = tgt.at[0, 0, 3, 5].set(jnp.nan)
    loss_nan = jax.block_until_ready(intensity_loss(inp, tgt_nan))
    assert bool(jnp.isnan(loss_nan)), float(loss_nan)

    # Larger shape: direct-from-HBM layout, two-way core split, masked partial tail chunk.
    N2, C2, H2, W2 = 1, 3, 512, 640
    inp2 = jax.random.normal(k3, (N2, C2, H2, W2), dtype=jnp.float32)
    tgt2 = jax.random.normal(k4, (N2, C2, H2, W2), dtype=jnp.float32)
    loss2 = jax.block_until_ready(intensity_loss(inp2, tgt2))
    ref2 = jax.block_until_ready(_reference(inp2, tgt2))
    assert abs(float(loss2) - float(ref2)) < 1e-6, (float(loss2), float(ref2))

    print("KERNEL_OK")
</pallas_src>

<mosaic_0001>
module attributes {stable_mosaic.version = 11 : i64} {
  func.func @_intensity_loss_kernel(%arg0: i32, %arg1: i32, %arg2: memref<3x8x128xf32, #tpu.memory_space<vmem>>, %arg3: memref<3x8x128xf32, #tpu.memory_space<vmem>>, %arg4: memref<1x8x128xf32, #tpu.memory_space<vmem>>) attributes {dimension_semantics = [#tpu.dimension_semantics<parallel>, #tpu.dimension_semantics<arbitrary>], iteration_bounds = array<i64: 1, 1>, scalar_prefetch = 0 : i64, scratch_operands = 0 : i64, tpu.core_type = #tpu.core_type<tc>, window_params = [{transform_indices = @transform_0, window_bounds = array<i64: 3, 8, 128>}, {transform_indices = @transform_1, window_bounds = array<i64: 3, 8, 128>}, {transform_indices = @transform_2, window_bounds = array<i64: 1, 8, 128>}]} {
    %c0_i32 = arith.constant 0 : i32
    %0 = arith.cmpi eq, %arg1, %c0_i32 : i32
    %1 = arith.extui %0 : i1 to i32
    %c0_i32_0 = arith.constant 0 : i32
    %2 = arith.cmpi ne, %1, %c0_i32_0 : i32
    scf.if %2 {
      %cst_14 = arith.constant 0.000000e+00 : f32
      %26 = vector.broadcast %cst_14 : f32 to vector<1x8x128xf32>
      %c0_15 = arith.constant 0 : index
      %c0_16 = arith.constant 0 : index
      %c0_17 = arith.constant 0 : index
      %27 = vector.load %arg4[%c0_15, %c0_16, %c0_17] : memref<1x8x128xf32, #tpu.memory_space<vmem>>, vector<1x8x128xf32>
      tpu.vector_store %arg4[%c0_15, %c0_16, %c0_17], %26 {strides = array<i32>} : memref<1x8x128xf32, #tpu.memory_space<vmem>>, vector<1x8x128xf32>,
    } else {
    }
    %c0 = arith.constant 0 : index
    %c0_1 = arith.constant 0 : index
    %c0_2 = arith.constant 0 : index
    %3 = vector.load %arg2[%c0, %c0_1, %c0_2] : memref<3x8x128xf32, #tpu.memory_space<vmem>>, vector<3x8x128xf32>
    %c0_3 = arith.constant 0 : index
    %c0_4 = arith.constant 0 : index
    %c0_5 = arith.constant 0 : index
    %4 = vector.load %arg3[%c0_3, %c0_4, %c0_5] : memref<3x8x128xf32, #tpu.memory_space<vmem>>, vector<3x8x128xf32>
    %cst = arith.constant 1.000000e+00 : f32
    %5 = vector.broadcast %cst : f32 to vector<3x8x128xf32>
    %6 = arith.addf %4, %5 : vector<3x8x128xf32>
    %7 = arith.mulf %3, %6 : vector<3x8x128xf32>
    %8 = vector.extract_strided_slice %7 {offsets = [0, 0, 0], sizes = [1, 8, 128], strides = [1, 1, 1]} : vector<3x8x128xf32> to vector<1x8x128xf32>
    %9 = vector.shape_cast %8 : vector<1x8x128xf32> to vector<8x128xf32>
    %10 = vector.extract_strided_slice %7 {offsets = [1, 0, 0], sizes = [1, 8, 128], strides = [1, 1, 1]} : vector<3x8x128xf32> to vector<1x8x128xf32>
    %11 = vector.shape_cast %10 : vector<1x8x128xf32> to vector<8x128xf32>
    %12 = arith.addf %9, %11 : vector<8x128xf32>
    %13 = vector.extract_strided_slice %7 {offsets = [2, 0, 0], sizes = [1, 8, 128], strides = [1, 1, 1]} : vector<3x8x128xf32> to vector<1x8x128xf32>
    %14 = vector.shape_cast %13 : vector<1x8x128xf32> to vector<8x128xf32>
    %15 = arith.addf %12, %14 : vector<8x128xf32>
    %cst_6 = arith.constant 3.000000e+00 : f32
    %16 = vector.broadcast %cst_6 : f32 to vector<8x128xf32>
    %17 = arith.divf %15, %16 : vector<8x128xf32>
    %18 = arith.subf %17, %17 : vector<8x128xf32>
    %19 = arith.mulf %18, %18 : vector<8x128xf32>
    %c0_7 = arith.constant 0 : index
    %c0_8 = arith.constant 0 : index
    %c0_9 = arith.constant 0 : index
    %20 = vector.load %arg4[%c0_7, %c0_8, %c0_9] : memref<1x8x128xf32, #tpu.memory_space<vmem>>, vector<1x8x128xf32>
    %21 = vector.shape_cast %19 : vector<8x128xf32> to vector<1x8x128xf32>
    %cst_10 = arith.constant dense<0.000000e+00> : vector<8x128xf32>
    %22 = vector.multi_reduction <add>, %21, %cst_10 [0] : vector<1x8x128xf32> to vector<8x128xf32>
    %23 = vector.shape_cast %22 : vector<8x128xf32> to vector<1x8x128xf32>
    %24 = arith.addf %20, %23 : vector<1x8x128xf32>
    %c0_11 = arith.constant 0 : index
    %c0_12 = arith.constant 0 : index
    %c0_13 = arith.constant 0 : index
    %25 = vector.load %arg4[%c0_11, %c0_12, %c0_13] : memref<1x8x128xf32, #tpu.memory_space<vmem>>, vector<1x8x128xf32>
    tpu.vector_store %arg4[%c0_11, %c0_12, %c0_13], %24 {strides = array<i32>} : memref<1x8x128xf32, #tpu.memory_space<vmem>>, vector<1x8x128xf32>,
    return
  }
  func.func @transform_0(%arg0: i32, %arg1: i32) -> (i32, i32, i32) {
    %c1_i32 = arith.constant 1 : i32
    %0 = arith.muli %arg0, %c1_i32 : i32
    %1 = arith.addi %0, %arg1 : i32
    %c0_i32 = arith.constant 0 : i32
    %2 = arith.minsi %1, %c0_i32 : i32
    %c0_i32_0 = arith.constant 0 : i32
    %c0_i32_1 = arith.constant 0 : i32
    %c0_i32_2 = arith.constant 0 : i32
    return %c0_i32_0, %2, %c0_i32_1 : i32, i32, i32
  }
  func.func @transform_1(%arg0: i32, %arg1: i32) -> (i32, i32, i32) {
    %c1_i32 = arith.constant 1 : i32
    %0 = arith.muli %arg0, %c1_i32 : i32
    %1 = arith.addi %0, %arg1 : i32
    %c0_i32 = arith.constant 0 : i32
    %2 = arith.minsi %1, %c0_i32 : i32
    %c0_i32_0 = arith.constant 0 : i32
    %c0_i32_1 = arith.constant 0 : i32
    %c0_i32_2 = arith.constant 0 : i32
    return %c0_i32_0, %2, %c0_i32_1 : i32, i32, i32
  }
  func.func @transform_2(%arg0: i32, %arg1: i32) -> (i32, i32, i32) {
    %c0_i32 = arith.constant 0 : i32
    %c0_i32_0 = arith.constant 0 : i32
    %c0_i32_1 = arith.constant 0 : i32
    return %arg0, %c0_i32, %c0_i32_0 : i32, i32, i32
  }
}

</mosaic_0001>

<llo_original>
// kernel: tpu_custom_call.1
$region0: #{tpu_custom_call.1}
  #allocation0 [shape = 'u32[]', space=smem, size = 0x4, offset = 0x4, fixed_abs, tag = 'smem constant byte address 0x4 - core index']
  #allocation1 [shape = 'u32[72,128]{1,0:T(1,128)}', space=vmem, size = 0x9000, scoped, tag = 'internal scratch']
  %s0 = inlined_call_operand.hbm [shape: f32[3,8,128], index: 0, kind: input, shape index: {}]
  %s1 = inlined_call_operand.hbm [shape: f32[3,8,128], index: 1, kind: input, shape index: {}]
  %s2 = inlined_call_operand.hbm [shape: f32[1,8,128], index: 2, kind: output, shape index: {}]
  %s3 = sld [smem:[#allocation0]]
  $region30: #{tpu_custom_call.1} parent=0
    _
  %s5 = ssub.s32 1, %s3
  %s6 = scalar_select 0, %s5, %s3
  $region1: #{tpu_custom_call.1} parent=0
    #allocation2 [shape = 'u8[12288]{0}', space=vmem, size = 0x3000, scoped, tag = 'input window, operand 0, single buffered']
    #allocation3 [shape = 's32[1]{0}', space=sflag, size = 0x4, scoped, tag = 'scoped memory for tpu_custom_call.1']
    #allocation4 [shape = 's32[1]{0}', space=sflag, size = 0x4, scoped, tag = 'scoped memory for tpu_custom_call.1']
    #allocation5 [shape = 'u8[12288]{0}', space=vmem, size = 0x3000, scoped, tag = 'input window, operand 1, single buffered']
    #allocation6 [shape = 's32[1]{0}', space=sflag, size = 0x4, scoped, tag = 'scoped memory for tpu_custom_call.1']
    #allocation7 [shape = 'u8[4096]{0}', space=vmem, size = 0x1000, scoped, tag = 'output window, operand 0, single buffered']
    %7 = vsyncpa [#allocation3], 0
    %8 = vsyncpa [#allocation6], 0
    %9 = vsyncpa [#allocation4], 0
    // Predicated region
    $region2: #{tpu_custom_call.1} parent=1 // pred_check
      _
    $region3: #{tpu_custom_call.1} parent=1 // pred_check_branch
      %11 = sbr.rel (0) target = $region5
    $region4: #{tpu_custom_call.1} parent=1 // pred_region
      %s12 = sadd.s32 0, 0
      %p13 = scmp.lt.s32.totalorder %s12, 0
      %s14 = scalar_select %p13, %s12, 0
      %16 = vsyncadd [#allocation3], 0
      %s17 = smul.addr %s14, 8
      %s18 = scalar_lea.hbm %s0, %s17
      %s19 = sshll.u32 %s18, 4
      %s20 = int_to_ptr.hbm [resolvable:$true] %s19
      %s21 = sshll.u32 [#allocation2], 4
      %s22 = int_to_ptr.vmem [resolvable:$true] %s21
      %27 = dma.hbm_to_vmem [thread:$0]  %s20, 384, %s22, [#allocation3], 128, 128, 8
    $region5: #{tpu_custom_call.1} parent=1 // pred_fallthru
      _
    // Predicated region
    $region6: #{tpu_custom_call.1} parent=1 // pred_check
      _
    $region7: #{tpu_custom_call.1} parent=1 // pred_check_branch
      %29 = sbr.rel (0) target = $region9
    $region8: #{tpu_custom_call.1} parent=1 // pred_region
      %s30 = sadd.s32 0, 0
      %p31 = scmp.lt.s32.totalorder %s30, 0
      %s32 = scalar_select %p31, %s30, 0
      %34 = vsyncadd [#allocation6], 0
      %s35 = smul.addr %s32, 8
      %s36 = scalar_lea.hbm %s1, %s35
      %s37 = sshll.u32 %s36, 4
      %s38 = int_to_ptr.hbm [resolvable:$true] %s37
      %s39 = sshll.u32 [#allocation5], 4
      %s40 = int_to_ptr.vmem [resolvable:$true] %s39
      %45 = dma.hbm_to_vmem [thread:$0]  %s38, 384, %s40, [#allocation6], 128, 128, 8
    $region9: #{tpu_custom_call.1} parent=1 // pred_fallthru
      _
    // Predicated region
    $region10: #{tpu_custom_call.1} parent=1 // pred_check
      _
    $region11: #{tpu_custom_call.1} parent=1 // pred_check_branch
      %47 = sbr.rel (0) target = $region13
    $region12: #{tpu_custom_call.1} parent=1 // pred_region
      %49 = dma.done [#allocation3], 384
    $region13: #{tpu_custom_call.1} parent=1 // pred_fallthru
      _
    // Predicated region
    $region14: #{tpu_custom_call.1} parent=1 // pred_check
      _
    $region15: #{tpu_custom_call.1} parent=1 // pred_check_branch
      %51 = sbr.rel (0) target = $region17
    $region16: #{tpu_custom_call.1} parent=1 // pred_region
      %53 = dma.done [#allocation6], 384
    $region17: #{tpu_custom_call.1} parent=1 // pred_fallthru
      _
    %s54 = sadd.s32 0, 0
    %p55 = scmp.lt.s32.totalorder %s54, 0
    %s56 = scalar_select %p55, %s54, 0
    %s57 = sadd.s32 0, 0
    %p58 = scmp.lt.s32.totalorder %s57, 0
    %s59 = scalar_select %p58, %s57, 0
    %p60 = scmp.eq.s32.totalorder 0, 0
    // Predicated region
    $region18: #{tpu_custom_call.1} parent=1 // pred_check
      %p61 = pneg %p60
    $region19: #{tpu_custom_call.1} parent=1 // pred_check_branch
      %63 = sbr.rel (%p61) target = $region21
    $region20: #{tpu_custom_call.1} parent=1 // pred_region
      %64 = vst [vmem:[#allocation7] sm:$0xff] 0.0
    $region21: #{tpu_custom_call.1} parent=1 // pred_fallthru
      _
    %v65 = vld [vmem:[#allocation2] sm:$0xff]
    %v66 = vld [vmem:[#allocation2 + $0x8] sm:$0xff]
    %v67 = vld [vmem:[#allocation2 + $0x10] sm:$0xff]
    %v68 = vld [vmem:[#allocation5] sm:$0xff]
    %v69 = vld [vmem:[#allocation5 + $0x8] sm:$0xff]
    %v70 = vld [vmem:[#allocation5 + $0x10] sm:$0xff]
    %v71 = vadd.f32 %v68, 1.0
    %v72 = vadd.f32 %v69, 1.0
    %v73 = vadd.f32 %v70, 1.0
    %v74 = vmul.f32 %v65, %v71
    %v75 = vmul.f32 %v66, %v72
    %v76 = vmul.f32 %v67, %v73
    %v77 = vadd.f32 %v74, %v75
    %v78 = vadd.f32 %v77, %v76
    %v79 = vrcp.pop 3.0
    %v80 = vmul.f32 3.0, %v79
    %v81 = vsub.f32 1.0, %v80
    %v82 = vmul.f32 %v79, %v81
    %v83 = vadd.f32 %v79, %v82
    %vm84 = vweird.f32 %v79
    %v85 = vsel %vm84, %v79, %v83
    %v86 = vmul.f32 %v78, %v85
    %v87 = vsub.f32 %v86, %v86
    %v88 = vmul.f32 %v87, %v87
    %v89 = vld [vmem:[#allocation7] sm:$0xff]
    %v90 = vadd.f32 %v88, 0.0
    %v91 = vadd.f32 %v89, %v90
    %92 = vst [vmem:[#allocation7] sm:$0xff] %v91
    // Predicated region
    $region22: #{tpu_custom_call.1} parent=1 // pred_check
      _
    $region23: #{tpu_custom_call.1} parent=1 // pred_check_branch
      %94 = sbr.rel (0) target = $region25
    $region24: #{tpu_custom_call.1} parent=1 // pred_region
      %96 = vsyncadd [#allocation4], 0
      %s98 = sshll.u32 [#allocation7], 4
      %s99 = int_to_ptr.vmem [resolvable:$true] %s98
      %s100 = sshll.u32 %s2, 4
      %s101 = int_to_ptr.hbm [resolvable:$true] %s100
      %103 = dma.vmem_to_hbm [thread:$0]  %s99, 128, %s101, [#allocation4]
    $region25: #{tpu_custom_call.1} parent=1 // pred_fallthru
      _
    // Predicated region
    $region26: #{tpu_custom_call.1} parent=1 // pred_check
      _
    $region27: #{tpu_custom_call.1} parent=1 // pred_check_branch
      %105 = sbr.rel (0) target = $region29
    $region28: #{tpu_custom_call.1} parent=1 // pred_region
      %107 = dma.done [#allocation4], 128
    $region29: #{tpu_custom_call.1} parent=1 // pred_fallthru
      _
    %108 = vsyncpa [#allocation3], 1
    %109 = vsyncpa [#allocation6], 1
    %110 = vsyncpa [#allocation4], 1

</llo_original>
